<compile_context>
chip_gen: v6e
topology: v6e:2x2x1
jax: 0.10.0
libtpu: 0.0.40
codegen_flags: <defaults>
</compile_context>

<pallas_src>
import jax
import jax.numpy as jnp
import numpy as np
from jax.experimental import pallas as pl
from jax.experimental.pallas import tpu as pltpu

# ---- config (mirrors P_GCN.__init_weight) ----
NUM_USERS = 16
NUM_ITEMS = 32
N = NUM_USERS + NUM_ITEMS       # total graph nodes
LATENT_DIM = 32                 # config['latent_dim_rec']
N_LAYERS = 3                    # config['n_layers']
GAMMA = 0.2                     # config['gamma']
DELTA = 0.8                     # config['delta']  -> self.X
BATCH = 8                       # forward batch of (user, item) pairs


def pgcn_kernel(user_idx_ref, item_idx_ref,              # scalar prefetch (SMEM)
                g_ref, emb_ref, emb0_ref, u_ref, v_ref,  # VMEM inputs
                scores_ref,                              # VMEM output (BATCH, 1)
                lo_ref):                                 # VMEM scratch (N, D)
    """Fused computAttention() + computer() propagation + forward() score."""
    G = g_ref[...]                       # (N, N)  bf16 (MXU input)
    E = emb_ref[...]                     # (N, D)  f32  = cat(user_w, item_w)
    E0 = emb0_ref[...]                   # (N, D)  f32  = cat(user_emb0, item_emb0)
    u = u_ref[...]                       # (1, N)  f32  = vector_u
    v = v_ref[...]                       # (1, N)  f32  = vector_v

    # ---- pass 1: attention logits  w_k = u @ G^k @ v^T  (f32 accumulation) ----
    # row recurrence u_k = u_{k-1} @ G keeps the matmul output lane-dense.
    w_raw = [jnp.sum(u * v, axis=1, keepdims=True)]          # w_0 (A_0 = I)
    uk = u
    for _ in range(N_LAYERS):
        uk = jnp.dot(uk.astype(jnp.bfloat16), G,
                     preferred_element_type=jnp.float32)      # (1, N)
        w_raw.append(jnp.sum(uk * v, axis=1, keepdims=True))  # (1, 1)

    # w_list = w_list / w_list.sum();  attention = softmax(w_list, dim=0)
    s = w_raw[0]
    for w in w_raw[1:]:
        s = s + w
    wn = [w / s for w in w_raw]
    m = wn[0]
    for w in wn[1:]:
        m = jnp.maximum(m, w)
    e = [jnp.exp(w - m) for w in wn]
    z = e[0]
    for t in e[1:]:
        z = z + t
    scale = DELTA / z                     # fold X = delta into the weights once
    att_s = [t * scale for t in e]        # att_s[k] = delta*softmax_k, (1,1) each

    # ---- pass 2: propagate & accumulate light_out on the fly ----
    # light_out = att_s[0]*E + gamma*(delta - att_s[0])*E0 + sum_k att_s[k] G^k E
    # (gamma*E0 term hoisted out of the layer loop; no G^k materialized,
    #  no per-layer (N, D) buffers; single final store).
    e0_coef = GAMMA * (DELTA - att_s[0])  # = gamma * delta * sum_{k>=1} softmax_k
    acc = att_s[0] * E + e0_coef * E0
    P = E
    for layer in range(N_LAYERS):
        P = jnp.dot(G, P.astype(jnp.bfloat16),
                    preferred_element_type=jnp.float32)       # G^(layer+1) @ E
        acc = acc + att_s[layer + 1] * P
    lo_ref[...] = acc                     # light_out stays in VMEM only

    # ---- epilogue: gather (user, item) rows + batched inner product ----
    u_rows = []
    i_rows = []
    for b in range(BATCH):                # BATCH is small & static -> unrolled
        u_rows.append(lo_ref[pl.ds(user_idx_ref[b], 1), :])   # (1, D)
        i_rows.append(lo_ref[pl.ds(item_idx_ref[b], 1), :])   # (1, D)
    U = jnp.concatenate(u_rows, axis=0)   # (BATCH, D)
    I = jnp.concatenate(i_rows, axis=0)   # (BATCH, D)
    scores_ref[...] = jnp.sum(U * I, axis=1, keepdims=True)   # (BATCH, 1)


def pgcn_forward(G, user_w, item_w, user_emb0, item_emb0, vec_u, vec_v,
                 users, items):
    all_emb = jnp.concatenate([user_w, item_w], axis=0)         # (N, D)
    all_emb0 = jnp.concatenate([user_emb0, item_emb0], axis=0)  # (N, D)
    G_bf16 = G.astype(jnp.bfloat16)            # bf16 MXU inputs, f32 accum
    user_rows = users.astype(jnp.int32)
    item_rows = (items + NUM_USERS).astype(jnp.int32)  # rows of light_out

    scores = pl.pallas_call(
        pgcn_kernel,
        out_shape=jax.ShapeDtypeStruct((BATCH, 1), jnp.float32),
        grid_spec=pltpu.PrefetchScalarGridSpec(
            num_scalar_prefetch=2,             # users, items -> SMEM
            grid=(1,),
            in_specs=[
                pl.BlockSpec((N, N), lambda i, ur, ir: (0, 0)),
                pl.BlockSpec((N, LATENT_DIM), lambda i, ur, ir: (0, 0)),
                pl.BlockSpec((N, LATENT_DIM), lambda i, ur, ir: (0, 0)),
                pl.BlockSpec((1, N), lambda i, ur, ir: (0, 0)),
                pl.BlockSpec((1, N), lambda i, ur, ir: (0, 0)),
            ],
            out_specs=pl.BlockSpec((BATCH, 1), lambda i, ur, ir: (0, 0)),
            scratch_shapes=[pltpu.VMEM((N, LATENT_DIM), jnp.float32)],
        ),
        compiler_params=pltpu.CompilerParams(
            dimension_semantics=("arbitrary",)),
    )(user_rows, item_rows, G_bf16, all_emb, all_emb0, vec_u, vec_v)
    return scores[:, 0]


def reference_forward(G, user_w, item_w, user_emb0, item_emb0, vec_u, vec_v,
                      users, items):
    """Pure-JAX f32 reference matching the PyTorch forward semantics
    (explicit graph powers, HIGHEST-precision matmuls)."""
    hp = jax.lax.Precision.HIGHEST
    all_emb = jnp.concatenate([user_w, item_w], axis=0)
    all_emb0 = jnp.concatenate([user_emb0, item_emb0], axis=0)
    w = [jnp.sum(vec_u * vec_v)]
    A = G
    layer_embs = []
    for _ in range(N_LAYERS):
        w.append(jnp.matmul(vec_u, jnp.matmul(A, vec_v.T, precision=hp),
                            precision=hp)[0, 0])
        layer_embs.append(jnp.matmul(A, all_emb, precision=hp) + GAMMA * all_emb0)
        A = jnp.matmul(G, A, precision=hp)
    w = jnp.stack(w)
    w = w / jnp.sum(w)
    att = jax.nn.softmax(w)
    out = DELTA * att[0] * all_emb
    for l in range(N_LAYERS):
        out = out + DELTA * att[l + 1] * layer_embs[l]
    ue = out[users]
    ie = out[NUM_USERS + items]
    return jnp.sum(ue * ie, axis=1)


if __name__ == "__main__":
    key = jax.random.PRNGKey(0)
    ku, ki, ku0, ki0, kvu, kvv, kr = jax.random.split(key, 7)

    # embedding_user / embedding_item weights (nn.Embedding default ~ N(0,1))
    user_w = jax.random.normal(ku, (NUM_USERS, LATENT_DIM), jnp.float32)
    item_w = jax.random.normal(ki, (NUM_ITEMS, LATENT_DIM), jnp.float32)
    # pretrained svd embeddings (deterministic synthetic stand-ins)
    user_emb0 = jax.random.normal(ku0, (NUM_USERS, LATENT_DIM), jnp.float32)
    item_emb0 = jax.random.normal(ki0, (NUM_ITEMS, LATENT_DIM), jnp.float32)
    # vector_u / vector_v ~ torch.rand
    vec_u = jax.random.uniform(kvu, (1, N), jnp.float32)
    vec_v = jax.random.uniform(kvv, (1, N), jnp.float32)

    # dense symmetric-normalized bipartite graph (dataset.getSparseGraph())
    R = (jax.random.uniform(kr, (NUM_USERS, NUM_ITEMS)) < 0.3).astype(jnp.float32)
    A_full = jnp.zeros((N, N), jnp.float32)
    A_full = A_full.at[:NUM_USERS, NUM_USERS:].set(R)
    A_full = A_full.at[NUM_USERS:, :NUM_USERS].set(R.T)
    deg = A_full.sum(axis=1)
    d_inv_sqrt = jnp.where(deg > 0, 1.0 / jnp.sqrt(deg), 0.0)
    G = d_inv_sqrt[:, None] * A_full * d_inv_sqrt[None, :]

    users = jnp.array([0, 3, 5, 7, 9, 11, 13, 15], dtype=jnp.int32)
    items = jnp.array([0, 2, 4, 8, 16, 20, 25, 31], dtype=jnp.int32)

    out = pgcn_forward(G, user_w, item_w, user_emb0, item_emb0,
                       vec_u, vec_v, users, items)
    out = jax.block_until_ready(out)

    ref = reference_forward(G, user_w, item_w, user_emb0, item_emb0,
                            vec_u, vec_v, users, items)
    # tolerance accounts for bf16 MXU inputs (f32 accumulation) in the kernel
    # vs. the HIGHEST-precision f32 reference.
    np.testing.assert_allclose(np.asarray(out), np.asarray(ref),
                               rtol=2e-2, atol=2e-2)
    print("KERNEL_OK")
</pallas_src>

<mosaic_0001>
module attributes {stable_mosaic.version = 11 : i64} {
  func.func @pgcn_kernel(%arg0: i32, %arg1: memref<8xi32, #tpu.memory_space<smem>>, %arg2: memref<8xi32, #tpu.memory_space<smem>>, %arg3: memref<48x48xbf16, #tpu.memory_space<vmem>>, %arg4: memref<48x32xf32, #tpu.memory_space<vmem>>, %arg5: memref<48x32xf32, #tpu.memory_space<vmem>>, %arg6: memref<1x48xf32, #tpu.memory_space<vmem>>, %arg7: memref<1x48xf32, #tpu.memory_space<vmem>>, %arg8: memref<8x1xf32, #tpu.memory_space<vmem>>, %arg9: memref<48x32xf32, #tpu.memory_space<vmem>>) attributes {dimension_semantics = [#tpu.dimension_semantics<arbitrary>], iteration_bounds = array<i64: 1>, scalar_prefetch = 2 : i64, scratch_operands = 1 : i64, tpu.core_type = #tpu.core_type<tc>, window_params = [{pipeline_mode = #tpu.pipeline_mode<synchronous>, transform_indices = @transform_0, window_bounds = array<i64: 48, 48>}, {pipeline_mode = #tpu.pipeline_mode<synchronous>, transform_indices = @transform_1, window_bounds = array<i64: 48, 32>}, {pipeline_mode = #tpu.pipeline_mode<synchronous>, transform_indices = @transform_2, window_bounds = array<i64: 48, 32>}, {pipeline_mode = #tpu.pipeline_mode<synchronous>, transform_indices = @transform_3, window_bounds = array<i64: 1, 48>}, {pipeline_mode = #tpu.pipeline_mode<synchronous>, transform_indices = @transform_4, window_bounds = array<i64: 1, 48>}, {pipeline_mode = #tpu.pipeline_mode<synchronous>, transform_indices = @transform_5, window_bounds = array<i64: 8, 1>}]} {
    %c0 = arith.constant 0 : index
    %c0_0 = arith.constant 0 : index
    %0 = vector.load %arg3[%c0, %c0_0] : memref<48x48xbf16, #tpu.memory_space<vmem>>, vector<48x48xbf16>
    %c0_1 = arith.constant 0 : index
    %c0_2 = arith.constant 0 : index
    %1 = vector.load %arg4[%c0_1, %c0_2] : memref<48x32xf32, #tpu.memory_space<vmem>>, vector<48x32xf32>
    %c0_3 = arith.constant 0 : index
    %c0_4 = arith.constant 0 : index
    %2 = vector.load %arg5[%c0_3, %c0_4] : memref<48x32xf32, #tpu.memory_space<vmem>>, vector<48x32xf32>
    %c0_5 = arith.constant 0 : index
    %c0_6 = arith.constant 0 : index
    %3 = vector.load %arg6[%c0_5, %c0_6] : memref<1x48xf32, #tpu.memory_space<vmem>>, vector<1x48xf32>
    %c0_7 = arith.constant 0 : index
    %c0_8 = arith.constant 0 : index
    %4 = vector.load %arg7[%c0_7, %c0_8] : memref<1x48xf32, #tpu.memory_space<vmem>>, vector<1x48xf32>
    %5 = arith.mulf %3, %4 : vector<1x48xf32>
    %cst = arith.constant dense<0.000000e+00> : vector<1xf32>
    %6 = vector.multi_reduction <add>, %5, %cst [1] : vector<1x48xf32> to vector<1xf32>
    %7 = vector.shape_cast %6 : vector<1xf32> to vector<1x1xf32>
    %8 = arith.truncf %3 : vector<1x48xf32> to vector<1x48xbf16>
    %cst_9 = arith.constant dense<0.000000e+00> : vector<1x48xf32>
    %9 = tpu.matmul %8, %0, %cst_9 {dimension_numbers = #tpu.dot_dimension_numbers<[1], [0], [0], [1], [0, 0, 1, 1], [], []>} : vector<1x48xbf16>, vector<48x48xbf16>, vector<1x48xf32> -> vector<1x48xf32>
    %10 = arith.mulf %9, %4 : vector<1x48xf32>
    %cst_10 = arith.constant dense<0.000000e+00> : vector<1xf32>
    %11 = vector.multi_reduction <add>, %10, %cst_10 [1] : vector<1x48xf32> to vector<1xf32>
    %12 = vector.shape_cast %11 : vector<1xf32> to vector<1x1xf32>
    %13 = arith.truncf %9 : vector<1x48xf32> to vector<1x48xbf16>
    %cst_11 = arith.constant dense<0.000000e+00> : vector<1x48xf32>
    %14 = tpu.matmul %13, %0, %cst_11 {dimension_numbers = #tpu.dot_dimension_numbers<[1], [0], [0], [1], [0, 0, 1, 1], [], []>} : vector<1x48xbf16>, vector<48x48xbf16>, vector<1x48xf32> -> vector<1x48xf32>
    %15 = arith.mulf %14, %4 : vector<1x48xf32>
    %cst_12 = arith.constant dense<0.000000e+00> : vector<1xf32>
    %16 = vector.multi_reduction <add>, %15, %cst_12 [1] : vector<1x48xf32> to vector<1xf32>
    %17 = vector.shape_cast %16 : vector<1xf32> to vector<1x1xf32>
    %18 = arith.truncf %14 : vector<1x48xf32> to vector<1x48xbf16>
    %cst_13 = arith.constant dense<0.000000e+00> : vector<1x48xf32>
    %19 = tpu.matmul %18, %0, %cst_13 {dimension_numbers = #tpu.dot_dimension_numbers<[1], [0], [0], [1], [0, 0, 1, 1], [], []>} : vector<1x48xbf16>, vector<48x48xbf16>, vector<1x48xf32> -> vector<1x48xf32>
    %20 = arith.mulf %19, %4 : vector<1x48xf32>
    %cst_14 = arith.constant dense<0.000000e+00> : vector<1xf32>
    %21 = vector.multi_reduction <add>, %20, %cst_14 [1] : vector<1x48xf32> to vector<1xf32>
    %22 = vector.shape_cast %21 : vector<1xf32> to vector<1x1xf32>
    %23 = arith.addf %7, %12 : vector<1x1xf32>
    %24 = arith.addf %23, %17 : vector<1x1xf32>
    %25 = arith.addf %24, %22 : vector<1x1xf32>
    %26 = arith.divf %7, %25 : vector<1x1xf32>
    %27 = arith.divf %12, %25 : vector<1x1xf32>
    %28 = arith.divf %17, %25 : vector<1x1xf32>
    %29 = arith.divf %22, %25 : vector<1x1xf32>
    %30 = arith.maximumf %26, %27 : vector<1x1xf32>
    %31 = arith.maximumf %30, %28 : vector<1x1xf32>
    %32 = arith.maximumf %31, %29 : vector<1x1xf32>
    %33 = arith.subf %26, %32 : vector<1x1xf32>
    %34 = math.exp %33 : vector<1x1xf32>
    %35 = arith.subf %27, %32 : vector<1x1xf32>
    %36 = math.exp %35 : vector<1x1xf32>
    %37 = arith.subf %28, %32 : vector<1x1xf32>
    %38 = math.exp %37 : vector<1x1xf32>
    %39 = arith.subf %29, %32 : vector<1x1xf32>
    %40 = math.exp %39 : vector<1x1xf32>
    %41 = arith.addf %34, %36 : vector<1x1xf32>
    %42 = arith.addf %41, %38 : vector<1x1xf32>
    %43 = arith.addf %42, %40 : vector<1x1xf32>
    %cst_15 = arith.constant 8.000000e-01 : f32
    %44 = vector.broadcast %cst_15 : f32 to vector<1x1xf32>
    %45 = arith.divf %44, %43 : vector<1x1xf32>
    %46 = arith.mulf %34, %45 : vector<1x1xf32>
    %47 = arith.mulf %36, %45 : vector<1x1xf32>
    %48 = arith.mulf %38, %45 : vector<1x1xf32>
    %49 = arith.mulf %40, %45 : vector<1x1xf32>
    %cst_16 = arith.constant 8.000000e-01 : f32
    %50 = vector.broadcast %cst_16 : f32 to vector<1x1xf32>
    %51 = arith.subf %50, %46 : vector<1x1xf32>
    %cst_17 = arith.constant 2.000000e-01 : f32
    %52 = vector.broadcast %cst_17 : f32 to vector<1x1xf32>
    %53 = arith.mulf %52, %51 : vector<1x1xf32>
    %54 = vector.broadcast %46 : vector<1x1xf32> to vector<48x32xf32>
    %55 = arith.mulf %54, %1 : vector<48x32xf32>
    %56 = vector.broadcast %53 : vector<1x1xf32> to vector<48x32xf32>
    %57 = arith.mulf %56, %2 : vector<48x32xf32>
    %58 = arith.addf %55, %57 : vector<48x32xf32>
    %59 = arith.truncf %1 : vector<48x32xf32> to vector<48x32xbf16>
    %cst_18 = arith.constant dense<0.000000e+00> : vector<48x32xf32>
    %60 = tpu.matmul %0, %59, %cst_18 {dimension_numbers = #tpu.dot_dimension_numbers<[1], [0], [0], [1], [0, 0, 1, 1], [], []>} : vector<48x48xbf16>, vector<48x32xbf16>, vector<48x32xf32> -> vector<48x32xf32>
    %61 = vector.broadcast %47 : vector<1x1xf32> to vector<48x32xf32>
    %62 = arith.mulf %61, %60 : vector<48x32xf32>
    %63 = arith.addf %58, %62 : vector<48x32xf32>
    %64 = arith.truncf %60 : vector<48x32xf32> to vector<48x32xbf16>
    %cst_19 = arith.constant dense<0.000000e+00> : vector<48x32xf32>
    %65 = tpu.matmul %0, %64, %cst_19 {dimension_numbers = #tpu.dot_dimension_numbers<[1], [0], [0], [1], [0, 0, 1, 1], [], []>} : vector<48x48xbf16>, vector<48x32xbf16>, vector<48x32xf32> -> vector<48x32xf32>
    %66 = vector.broadcast %48 : vector<1x1xf32> to vector<48x32xf32>
    %67 = arith.mulf %66, %65 : vector<48x32xf32>
    %68 = arith.addf %63, %67 : vector<48x32xf32>
    %69 = arith.truncf %65 : vector<48x32xf32> to vector<48x32xbf16>
    %cst_20 = arith.constant dense<0.000000e+00> : vector<48x32xf32>
    %70 = tpu.matmul %0, %69, %cst_20 {dimension_numbers = #tpu.dot_dimension_numbers<[1], [0], [0], [1], [0, 0, 1, 1], [], []>} : vector<48x48xbf16>, vector<48x32xbf16>, vector<48x32xf32> -> vector<48x32xf32>
    %71 = vector.broadcast %49 : vector<1x1xf32> to vector<48x32xf32>
    %72 = arith.mulf %71, %70 : vector<48x32xf32>
    %73 = arith.addf %68, %72 : vector<48x32xf32>
    %c0_21 = arith.constant 0 : index
    %c0_22 = arith.constant 0 : index
    %74 = vector.load %arg9[%c0_21, %c0_22] : memref<48x32xf32, #tpu.memory_space<vmem>>, vector<48x32xf32>
    tpu.vector_store %arg9[%c0_21, %c0_22], %73 {strides = array<i32>} : memref<48x32xf32, #tpu.memory_space<vmem>>, vector<48x32xf32>,
    %c0_23 = arith.constant 0 : index
    %75 = memref.load %arg1[%c0_23] : memref<8xi32, #tpu.memory_space<smem>>
    %76 = arith.index_cast %75 : i32 to index
    %c0_24 = arith.constant 0 : index
    %77 = vector.load %arg9[%76, %c0_24] : memref<48x32xf32, #tpu.memory_space<vmem>>, vector<1x32xf32>
    %c0_25 = arith.constant 0 : index
    %78 = memref.load %arg2[%c0_25] : memref<8xi32, #tpu.memory_space<smem>>
    %79 = arith.index_cast %78 : i32 to index
    %c0_26 = arith.constant 0 : index
    %80 = vector.load %arg9[%79, %c0_26] : memref<48x32xf32, #tpu.memory_space<vmem>>, vector<1x32xf32>
    %c1 = arith.constant 1 : index
    %81 = memref.load %arg1[%c1] : memref<8xi32, #tpu.memory_space<smem>>
    %82 = arith.index_cast %81 : i32 to index
    %c0_27 = arith.constant 0 : index
    %83 = vector.load %arg9[%82, %c0_27] : memref<48x32xf32, #tpu.memory_space<vmem>>, vector<1x32xf32>
    %c1_28 = arith.constant 1 : index
    %84 = memref.load %arg2[%c1_28] : memref<8xi32, #tpu.memory_space<smem>>
    %85 = arith.index_cast %84 : i32 to index
    %c0_29 = arith.constant 0 : index
    %86 = vector.load %arg9[%85, %c0_29] : memref<48x32xf32, #tpu.memory_space<vmem>>, vector<1x32xf32>
    %c2 = arith.constant 2 : index
    %87 = memref.load %arg1[%c2] : memref<8xi32, #tpu.memory_space<smem>>
    %88 = arith.index_cast %87 : i32 to index
    %c0_30 = arith.constant 0 : index
    %89 = vector.load %arg9[%88, %c0_30] : memref<48x32xf32, #tpu.memory_space<vmem>>, vector<1x32xf32>
    %c2_31 = arith.constant 2 : index
    %90 = memref.load %arg2[%c2_31] : memref<8xi32, #tpu.memory_space<smem>>
    %91 = arith.index_cast %90 : i32 to index
    %c0_32 = arith.constant 0 : index
    %92 = vector.load %arg9[%91, %c0_32] : memref<48x32xf32, #tpu.memory_space<vmem>>, vector<1x32xf32>
    %c3 = arith.constant 3 : index
    %93 = memref.load %arg1[%c3] : memref<8xi32, #tpu.memory_space<smem>>
    %94 = arith.index_cast %93 : i32 to index
    %c0_33 = arith.constant 0 : index
    %95 = vector.load %arg9[%94, %c0_33] : memref<48x32xf32, #tpu.memory_space<vmem>>, vector<1x32xf32>
    %c3_34 = arith.constant 3 : index
    %96 = memref.load %arg2[%c3_34] : memref<8xi32, #tpu.memory_space<smem>>
    %97 = arith.index_cast %96 : i32 to index
    %c0_35 = arith.constant 0 : index
    %98 = vector.load %arg9[%97, %c0_35] : memref<48x32xf32, #tpu.memory_space<vmem>>, vector<1x32xf32>
    %c4 = arith.constant 4 : index
    %99 = memref.load %arg1[%c4] : memref<8xi32, #tpu.memory_space<smem>>
    %100 = arith.index_cast %99 : i32 to index
    %c0_36 = arith.constant 0 : index
    %101 = vector.load %arg9[%100, %c0_36] : memref<48x32xf32, #tpu.memory_space<vmem>>, vector<1x32xf32>
    %c4_37 = arith.constant 4 : index
    %102 = memref.load %arg2[%c4_37] : memref<8xi32, #tpu.memory_space<smem>>
    %103 = arith.index_cast %102 : i32 to index
    %c0_38 = arith.constant 0 : index
    %104 = vector.load %arg9[%103, %c0_38] : memref<48x32xf32, #tpu.memory_space<vmem>>, vector<1x32xf32>
    %c5 = arith.constant 5 : index
    %105 = memref.load %arg1[%c5] : memref<8xi32, #tpu.memory_space<smem>>
    %106 = arith.index_cast %105 : i32 to index
    %c0_39 = arith.constant 0 : index
    %107 = vector.load %arg9[%106, %c0_39] : memref<48x32xf32, #tpu.memory_space<vmem>>, vector<1x32xf32>
    %c5_40 = arith.constant 5 : index
    %108 = memref.load %arg2[%c5_40] : memref<8xi32, #tpu.memory_space<smem>>
    %109 = arith.index_cast %108 : i32 to index
    %c0_41 = arith.constant 0 : index
    %110 = vector.load %arg9[%109, %c0_41] : memref<48x32xf32, #tpu.memory_space<vmem>>, vector<1x32xf32>
    %c6 = arith.constant 6 : index
    %111 = memref.load %arg1[%c6] : memref<8xi32, #tpu.memory_space<smem>>
    %112 = arith.index_cast %111 : i32 to index
    %c0_42 = arith.constant 0 : index
    %113 = vector.load %arg9[%112, %c0_42] : memref<48x32xf32, #tpu.memory_space<vmem>>, vector<1x32xf32>
    %c6_43 = arith.constant 6 : index
    %114 = memref.load %arg2[%c6_43] : memref<8xi32, #tpu.memory_space<smem>>
    %115 = arith.index_cast %114 : i32 to index
    %c0_44 = arith.constant 0 : index
    %116 = vector.load %arg9[%115, %c0_44] : memref<48x32xf32, #tpu.memory_space<vmem>>, vector<1x32xf32>
    %c7 = arith.constant 7 : index
    %117 = memref.load %arg1[%c7] : memref<8xi32, #tpu.memory_space<smem>>
    %118 = arith.index_cast %117 : i32 to index
    %c0_45 = arith.constant 0 : index
    %119 = vector.load %arg9[%118, %c0_45] : memref<48x32xf32, #tpu.memory_space<vmem>>, vector<1x32xf32>
    %c7_46 = arith.constant 7 : index
    %120 = memref.load %arg2[%c7_46] : memref<8xi32, #tpu.memory_space<smem>>
    %121 = arith.index_cast %120 : i32 to index
    %c0_47 = arith.constant 0 : index
    %122 = vector.load %arg9[%121, %c0_47] : memref<48x32xf32, #tpu.memory_space<vmem>>, vector<1x32xf32>
    %123 = tpu.concatenate %77, %83, %89, %95, %101, %107, %113, %119 in 0 : vector<1x32xf32>, vector<1x32xf32>, vector<1x32xf32>, vector<1x32xf32>, vector<1x32xf32>, vector<1x32xf32>, vector<1x32xf32>, vector<1x32xf32> -> vector<8x32xf32>
    %124 = tpu.concatenate %80, %86, %92, %98, %104, %110, %116, %122 in 0 : vector<1x32xf32>, vector<1x32xf32>, vector<1x32xf32>, vector<1x32xf32>, vector<1x32xf32>, vector<1x32xf32>, vector<1x32xf32>, vector<1x32xf32> -> vector<8x32xf32>
    %125 = arith.mulf %123, %124 : vector<8x32xf32>
    %cst_48 = arith.constant dense<0.000000e+00> : vector<8xf32>
    %126 = vector.multi_reduction <add>, %125, %cst_48 [1] : vector<8x32xf32> to vector<8xf32>
    %127 = vector.shape_cast %126 : vector<8xf32> to vector<8x1xf32>
    %c0_49 = arith.constant 0 : index
    %c0_50 = arith.constant 0 : index
    %128 = vector.load %arg8[%c0_49, %c0_50] : memref<8x1xf32, #tpu.memory_space<vmem>>, vector<8x1xf32>
    tpu.vector_store %arg8[%c0_49, %c0_50], %127 {strides = array<i32>} : memref<8x1xf32, #tpu.memory_space<vmem>>, vector<8x1xf32>,
    return
  }
  func.func @transform_0(%arg0: i32, %arg1: memref<8xi32, #tpu.memory_space<smem>>, %arg2: memref<8xi32, #tpu.memory_space<smem>>) -> (i32, i32) {
    %c0_i32 = arith.constant 0 : i32
    %c0_i32_0 = arith.constant 0 : i32
    %c0_i32_1 = arith.constant 0 : i32
    return %c0_i32, %c0_i32_0 : i32, i32
  }
  func.func @transform_1(%arg0: i32, %arg1: memref<8xi32, #tpu.memory_space<smem>>, %arg2: memref<8xi32, #tpu.memory_space<smem>>) -> (i32, i32) {
    %c0_i32 = arith.constant 0 : i32
    %c0_i32_0 = arith.constant 0 : i32
    %c0_i32_1 = arith.constant 0 : i32
    return %c0_i32, %c0_i32_0 : i32, i32
  }
  func.func @transform_2(%arg0: i32, %arg1: memref<8xi32, #tpu.memory_space<smem>>, %arg2: memref<8xi32, #tpu.memory_space<smem>>) -> (i32, i32) {
    %c0_i32 = arith.constant 0 : i32
    %c0_i32_0 = arith.constant 0 : i32
    %c0_i32_1 = arith.constant 0 : i32
    return %c0_i32, %c0_i32_0 : i32, i32
  }
  func.func @transform_3(%arg0: i32, %arg1: memref<8xi32, #tpu.memory_space<smem>>, %arg2: memref<8xi32, #tpu.memory_space<smem>>) -> (i32, i32) {
    %c0_i32 = arith.constant 0 : i32
    %c0_i32_0 = arith.constant 0 : i32
    %c0_i32_1 = arith.constant 0 : i32
    return %c0_i32, %c0_i32_0 : i32, i32
  }
  func.func @transform_4(%arg0: i32, %arg1: memref<8xi32, #tpu.memory_space<smem>>, %arg2: memref<8xi32, #tpu.memory_space<smem>>) -> (i32, i32) {
    %c0_i32 = arith.constant 0 : i32
    %c0_i32_0 = arith.constant 0 : i32
    %c0_i32_1 = arith.constant 0 : i32
    return %c0_i32, %c0_i32_0 : i32, i32
  }
  func.func @transform_5(%arg0: i32, %arg1: memref<8xi32, #tpu.memory_space<smem>>, %arg2: memref<8xi32, #tpu.memory_space<smem>>) -> (i32, i32) {
    %c0_i32 = arith.constant 0 : i32
    %c0_i32_0 = arith.constant 0 : i32
    %c0_i32_1 = arith.constant 0 : i32
    return %c0_i32, %c0_i32_0 : i32, i32
  }
}

</mosaic_0001>

<llo_original>
// kernel: tpu_custom_call.1
$region0: #{tpu_custom_call.1}
  #allocation0 [shape = 'u32[]', space=smem, size = 0x4, offset = 0x4, fixed_abs, tag = 'smem constant byte address 0x4 - core index']
  #allocation1 [shape = 'u32[144,128]{1,0:T(1,128)}', space=vmem, size = 0x12000, scoped, tag = 'internal scratch']
  #allocation2 [shape = 'f32[48,32]{1,0:T(8,128)}', space=vmem, size = 0x6000, scoped, tag = 'scratch operand']
  #allocation3 [shape = 's32[1]{0}', space=sflag, size = 0x4, scoped, tag = 'scoped memory for tpu_custom_call.1']
  #allocation4 [shape = 'u8[512]{0}', space=smem, size = 0x200, scoped, tag = 'prefetched SMEM operand 0']
  #allocation5 [shape = 'u8[512]{0}', space=smem, size = 0x200, scoped, tag = 'prefetched SMEM operand 1']
  %s0 = inlined_call_operand.vmem [shape: s32[8], index: 0, kind: input, shape index: {}]
  %s1 = inlined_call_operand.vmem [shape: s32[8], index: 1, kind: input, shape index: {}]
  %s2 = inlined_call_operand.vmem [shape: bf16[48,48], index: 2, kind: input, shape index: {}]
  %s3 = inlined_call_operand.vmem [shape: f32[48,32], index: 3, kind: input, shape index: {}]
  %s4 = inlined_call_operand.vmem [shape: f32[48,32], index: 4, kind: input, shape index: {}]
  %s5 = inlined_call_operand.vmem [shape: f32[1,48], index: 5, kind: input, shape index: {}]
  %s6 = inlined_call_operand.vmem [shape: f32[1,48], index: 6, kind: input, shape index: {}]
  %s7 = inlined_call_operand.vmem [shape: f32[8,1], index: 7, kind: output, shape index: {}]
  %s8 = sld [smem:[#allocation0]]
  $region30: #{tpu_custom_call.1} parent=0
    _
  %s10 = ssub.s32 1, %s8
  %s11 = scalar_select 0, %s10, %s8
  %s12 = sshll.u32 %s0, 4
  %s13 = int_to_ptr.vmem [resolvable:$true] %s12
  %15 = dma.vmem_to_smem %s13, 16, [#allocation4], [#allocation3]
  %s16 = sshll.u32 %s1, 4
  %s17 = int_to_ptr.vmem [resolvable:$true] %s16
  %19 = dma.vmem_to_smem %s17, 16, [#allocation5], [#allocation3]
  %20 = dma.done [#allocation3], 32
  %21 = sfence
  // Predicated region
  $region2: #{tpu_custom_call.1} parent=0 // pred_check
    _
  $region3: #{tpu_custom_call.1} parent=0 // pred_check_branch
    %23 = sbr.rel (0) target = $region5
  $region4: #{tpu_custom_call.1} parent=0 // pred_region
    _
  $region5: #{tpu_custom_call.1} parent=0 // pred_fallthru
    _
  // Predicated region
  $region6: #{tpu_custom_call.1} parent=0 // pred_check
    _
  $region7: #{tpu_custom_call.1} parent=0 // pred_check_branch
    %25 = sbr.rel (0) target = $region9
  $region8: #{tpu_custom_call.1} parent=0 // pred_region
    _
  $region9: #{tpu_custom_call.1} parent=0 // pred_fallthru
    _
  // Predicated region
  $region10: #{tpu_custom_call.1} parent=0 // pred_check
    _
  $region11: #{tpu_custom_call.1} parent=0 // pred_check_branch
    %27 = sbr.rel (0) target = $region13
  $region12: #{tpu_custom_call.1} parent=0 // pred_region
    _
  $region13: #{tpu_custom_call.1} parent=0 // pred_fallthru
    _
  // Predicated region
  $region14: #{tpu_custom_call.1} parent=0 // pred_check
    _
  $region15: #{tpu_custom_call.1} parent=0 // pred_check_branch
    %29 = sbr.rel (0) target = $region17
  $region16: #{tpu_custom_call.1} parent=0 // pred_region
    _
  $region17: #{tpu_custom_call.1} parent=0 // pred_fallthru
    _
  // Predicated region
  $region18: #{tpu_custom_call.1} parent=0 // pred_check
    _
  $region19: #{tpu_custom_call.1} parent=0 // pred_check_branch
    %31 = sbr.rel (0) target = $region21
  $region20: #{tpu_custom_call.1} parent=0 // pred_region
    _
  $region21: #{tpu_custom_call.1} parent=0 // pred_fallthru
    _
  %v33 = vld [vmem:[%s2] sm:$0xf]
  %v34 = vld [vmem:[%s2 + $0x4] sm:$0xf]
  %v35 = vld [vmem:[%s2 + $0x8] sm:$0xf]
  %v36 = vld [vmem:[%s2 + $0xc] sm:$0xf]
  %v37 = vld [vmem:[%s2 + $0x10] sm:$0xf]
  %v38 = vld [vmem:[%s2 + $0x14] sm:$0xf]
  %v39 = vld [vmem:[%s3] sm:$0xff]
  %v40 = vld [vmem:[%s3 + $0x8] sm:$0xff]
  %v41 = vld [vmem:[%s3 + $0x10] sm:$0xff]
  %v42 = vld [vmem:[%s3 + $0x18] sm:$0xff]
  %v43 = vld [vmem:[%s3 + $0x20] sm:$0xff]
  %v44 = vld [vmem:[%s3 + $0x28] sm:$0xff]
  %v45 = vld [vmem:[%s4] sm:$0xff]
  %v46 = vld [vmem:[%s4 + $0x8] sm:$0xff]
  %v47 = vld [vmem:[%s4 + $0x10] sm:$0xff]
  %v48 = vld [vmem:[%s4 + $0x18] sm:$0xff]
  %v49 = vld [vmem:[%s4 + $0x20] sm:$0xff]
  %v50 = vld [vmem:[%s4 + $0x28] sm:$0xff]
  %v51 = vld [vmem:[%s5] sm:$0x1]
  %v52 = vld [vmem:[%s6] sm:$0x1]
  %v53 = vmul.f32 %v51, %v52
  %vm54 = vcmask 385024
  %v55 = vsel %vm54, %v53, 0.0
  %56 = vadd.xlane.f32.xlu0 %v55
  %v57 = vpop.xlane.xlu0 %56
  %v58 = vpack.c.bf16 %v51, %v51
  %v65 = vunpack.c.l.b16 %v33
  %v66 = vunpack.c.l.b16 %v34
  %v67 = vunpack.c.l.b16 %v35
  %v68 = vunpack.c.l.b16 %v36
  %v69 = vunpack.c.l.b16 %v37
  %v70 = vunpack.c.l.b16 %v38
  %v71 = vpack.c.b16 %v66, %v65
  %v72 = vpack.c.b16 %v68, %v67
  %v73 = vpack.c.b16 %v70, %v69
  %vm77 = vcmask 392192
  %v79 = vsel %vm77, %v58, 0
  %81 = vmatprep.subr.bf16.mxu0 0
  %82 = vmatpush1.bf16.msra.mxu0 0
  %83 = vmatprep.subr.bf16.mxu0 0
  %84 = vmatpush1.bf16.msra.mxu0 0
  %85 = vmatprep.subr.bf16.mxu0 0
  %86 = vmatpush1.bf16.msra.mxu0 0
  %87 = vmatprep.subr.bf16.mxu0 0
  %88 = vmatpush1.bf16.msra.mxu0 0
  %89 = vmatprep.subr.bf16.mxu0 0
  %90 = vmatpush1.bf16.msra.mxu0 0
  %91 = vmatprep.subr.bf16.mxu0 0
  %92 = vmatpush1.bf16.msra.mxu0 %v73
  %93 = vmatprep.subr.bf16.mxu0 0
  %94 = vmatpush1.bf16.msra.mxu0 %v72
  %95 = vmatprep.subr.bf16.mxu0 0
  %96 = vmatpush1.bf16.msra.mxu0 %v71
  %97 = vmatprep.subr.bf16.mxu0 0
  %98 = vmatpush2.bf16.msra.mxu0 0
  %99 = vmatprep.subr.bf16.mxu0 0
  %100 = vmatpush2.bf16.msra.mxu0 0
  %101 = vmatprep.subr.bf16.mxu0 0
  %102 = vmatpush2.bf16.msra.mxu0 0
  %103 = vmatprep.subr.bf16.mxu0 0
  %104 = vmatpush2.bf16.msra.mxu0 0
  %105 = vmatprep.subr.bf16.mxu0 0
  %106 = vmatpush2.bf16.msra.mxu0 0
  %107 = vmatprep.subr.bf16.mxu0 0
  %108 = vmatpush2.bf16.msra.mxu0 0
  %109 = vmatprep.subr.bf16.mxu0 0
  %110 = vmatpush2.bf16.msra.mxu0 0
  %111 = vmatprep.subr.bf16.mxu0 0
  %112 = vmatpush2.bf16.msra.mxu0 0
  %113 = vmatprep.mubr.bf16.mxu0 0
  %114 = vmatmul.mubr.bf16.gmra.mxu0 %v79
  %v115 = vpop.f32.mrf.mxu0
  %v116 = vadd.f32 0.0, %v115
  %v117 = vpop.f32.mrf.mxu0
  %v118 = vpop.f32.mrf.mxu0
  %v119 = vpop.f32.mrf.mxu0
  %120 = vdwg.mxu0
  %v121 = vmul.f32 %v116, %v52
  %v122 = vsel %vm54, %v121, 0.0
  %123 = vadd.xlane.f32.xlu0 %v122
  %v124 = vpop.xlane.xlu0 %123
  %v125 = vpack.c.bf16 %v116, %v116
  %v127 = vsel %vm77, %v125, 0
  %129 = vmatprep.subr.bf16.mxu0 0
  %130 = vmatpush1.bf16.msra.mxu0 0
  %131 = vmatprep.subr.bf16.mxu0 0
  %132 = vmatpush1.bf16.msra.mxu0 0
  %133 = vmatprep.subr.bf16.mxu0 0
  %134 = vmatpush1.bf16.msra.mxu0 0
  %135 = vmatprep.subr.bf16.mxu0 0
  %136 = vmatpush1.bf16.msra.mxu0 0
  %137 = vmatprep.subr.bf16.mxu0 0
  %138 = vmatpush1.bf16.msra.mxu0 0
  %139 = vmatprep.subr.bf16.mxu0 0
  %140 = vmatpush1.bf16.msra.mxu0 %v73
  %141 = vmatprep.subr.bf16.mxu0 0
  %142 = vmatpush1.bf16.msra.mxu0 %v72
  %143 = vmatprep.subr.bf16.mxu0 0
  %144 = vmatpush1.bf16.msra.mxu0 %v71
  %145 = vmatprep.subr.bf16.mxu0 0
  %146 = vmatpush2.bf16.msra.mxu0 0
  %147 = vmatprep.subr.bf16.mxu0 0
  %148 = vmatpush2.bf16.msra.mxu0 0
  %149 = vmatprep.subr.bf16.mxu0 0
  %150 = vmatpush2.bf16.msra.mxu0 0
  %151 = vmatprep.subr.bf16.mxu0 0
  %152 = vmatpush2.bf16.msra.mxu0 0
  %153 = vmatprep.subr.bf16.mxu0 0
  %154 = vmatpush2.bf16.msra.mxu0 0
  %155 = vmatprep.subr.bf16.mxu0 0
  %156 = vmatpush2.bf16.msra.mxu0 0
  %157 = vmatprep.subr.bf16.mxu0 0
  %158 = vmatpush2.bf16.msra.mxu0 0
  %159 = vmatprep.subr.bf16.mxu0 0
  %160 = vmatpush2.bf16.msra.mxu0 0
  %161 = vmatprep.mubr.bf16.mxu0 0
  %162 = vmatmul.mubr.bf16.gmra.mxu0 %v127
  %v163 = vpop.f32.mrf.mxu0
  %v164 = vadd.f32 0.0, %v163
  %v165 = vpop.f32.mrf.mxu0
  %v166 = vpop.f32.mrf.mxu0
  %v167 = vpop.f32.mrf.mxu0
  %168 = vdwg.mxu0
  %v169 = vmul.f32 %v164, %v52
  %v170 = vsel %vm54, %v169, 0.0
  %171 = vadd.xlane.f32.xlu0 %v170
  %v172 = vpop.xlane.xlu0 %171
  %v173 = vpack.c.bf16 %v164, %v164
  %v175 = vsel %vm77, %v173, 0
  %177 = vmatprep.subr.bf16.mxu0 0
  %178 = vmatpush1.bf16.msra.mxu0 0
  %179 = vmatprep.subr.bf16.mxu0 0
  %180 = vmatpush1.bf16.msra.mxu0 0
  %181 = vmatprep.subr.bf16.mxu0 0
  %182 = vmatpush1.bf16.msra.mxu0 0
  %183 = vmatprep.subr.bf16.mxu0 0
  %184 = vmatpush1.bf16.msra.mxu0 0
  %185 = vmatprep.subr.bf16.mxu0 0
  %186 = vmatpush1.bf16.msra.mxu0 0
  %187 = vmatprep.subr.bf16.mxu0 0
  %188 = vmatpush1.bf16.msra.mxu0 %v73
  %189 = vmatprep.subr.bf16.mxu0 0
  %190 = vmatpush1.bf16.msra.mxu0 %v72
  %191 = vmatprep.subr.bf16.mxu0 0
  %192 = vmatpush1.bf16.msra.mxu0 %v71
  %193 = vmatprep.subr.bf16.mxu0 0
  %194 = vmatpush2.bf16.msra.mxu0 0
  %195 = vmatprep.subr.bf16.mxu0 0
  %196 = vmatpush2.bf16.msra.mxu0 0
  %197 = vmatprep.subr.bf16.mxu0 0
  %198 = vmatpush2.bf16.msra.mxu0 0
  %199 = vmatprep.subr.bf16.mxu0 0
  %200 = vmatpush2.bf16.msra.mxu0 0
  %201 = vmatprep.subr.bf16.mxu0 0
  %202 = vmatpush2.bf16.msra.mxu0 0
  %203 = vmatprep.subr.bf16.mxu0 0
  %204 = vmatpush2.bf16.msra.mxu0 0
  %205 = vmatprep.subr.bf16.mxu0 0
  %206 = vmatpush2.bf16.msra.mxu0 0
  %207 = vmatprep.subr.bf16.mxu0 0
  %208 = vmatpush2.bf16.msra.mxu0 0
  %209 = vmatprep.mubr.bf16.mxu0 0
  %210 = vmatmul.mubr.bf16.gmra.mxu0 %v175
  %v211 = vpop.f32.mrf.mxu0
  %v212 = vadd.f32 0.0, %v211
  %v213 = vpop.f32.mrf.mxu0
  %v214 = vpop.f32.mrf.mxu0
  %v215 = vpop.f32.mrf.mxu0
  %216 = vdwg.mxu0
  %v217 = vmul.f32 %v212, %v52
  %v218 = vsel %vm54, %v217, 0.0
  %219 = vadd.xlane.f32.xlu0 %v218
  %v220 = vpop.xlane.xlu0 %219
  %v221 = vadd.f32 %v57, %v124
  %v222 = vadd.f32 %v221, %v172
  %v223 = vadd.f32 %v222, %v220
  %v224 = vrcp.pop %v223
  %v225 = vmul.f32 %v57, %v224
  %v226 = vmul.f32 %v124, %v224
  %v227 = vmul.f32 %v172, %v224
  %v228 = vmul.f32 %v220, %v224
  %v229 = vmax.f32 %v225, %v226
  %v230 = vmax.f32 %v229, %v227
  %v231 = vmax.f32 %v230, %v228
  %v232 = vsub.f32 %v225, %v231
  %v233 = vmul.f32 %v232, 1.442695
  %v234 = vpow.pop %v233
  %v235 = vsub.f32 %v226, %v231
  %v236 = vmul.f32 %v235, 1.442695
  %v237 = vpow.pop %v236
  %v238 = vsub.f32 %v227, %v231
  %v239 = vmul.f32 %v238, 1.442695
  %v240 = vpow.pop %v239
  %v241 = vsub.f32 %v228, %v231
  %v242 = vmul.f32 %v241, 1.442695
  %v243 = vpow.pop %v242
  %v244 = vadd.f32 %v234, %v237
  %v245 = vadd.f32 %v244, %v240
  %v246 = vadd.f32 %v245, %v243
  %v247 = vrcp.pop %v246
  %v248 = vmul.f32 0.8, %v247
  %v249 = vmul.f32 %v234, %v248
  %v250 = vmul.f32 %v237, %v248
  %v251 = vmul.f32 %v240, %v248
  %v252 = vmul.f32 %v243, %v248
  %v253 = vsub.f32 0.8, %v249
  %v254 = vmul.f32 %v253, 0.2
  %v255 = vlaneseq
  %v256 = vshrl.u32 %v255, 7
  %v257 = vsub.s32 0, %v256
  %v258 = vrot.slane %v249, %v257
  %v259 = vmul.f32 %v258, %v39
  %v260 = vmul.f32 %v258, %v40
  %v261 = vmul.f32 %v258, %v41
  %v262 = vmul.f32 %v258, %v42
  %v263 = vmul.f32 %v258, %v43
  %v264 = vmul.f32 %v258, %v44
  %v265 = vlaneseq
  %v266 = vshrl.u32 %v265, 7
  %v267 = vsub.s32 0, %v266
  %v268 = vrot.slane %v254, %v267
  %v269 = vmul.f32 %v268, %v45
  %v270 = vmul.f32 %v268, %v46
  %v271 = vmul.f32 %v268, %v47
  %v272 = vmul.f32 %v268, %v48
  %v273 = vmul.f32 %v268, %v49
  %v274 = vmul.f32 %v268, %v50
  %v275 = vadd.f32 %v259, %v269
  %v276 = vadd.f32 %v260, %v270
  %v277 = vadd.f32 %v261, %v271
  %v278 = vadd.f32 %v262, %v272
  %v279 = vadd.f32 %v263, %v273
  %v280 = vadd.f32 %v264, %v274
  %v281 = vpack.c.bf16 %v40, %v39
  %v282 = vpack.c.bf16 %v42, %v41
  %v283 = vpack.c.bf16 %v44, %v43
  %v285 = vsel %vm77, %v71, 0
  %v288 = vsel %vm77, %v72, 0
  %v291 = vsel %vm77, %v73, 0
  %293 = vmatprep.subr.bf16.mxu0 0
  %294 = vmatpush1.bf16.msra.mxu0 0
  %295 = vmatprep.subr.bf16.mxu0 0
  %296 = vmatpush1.bf16.msra.mxu0 0
  %297 = vmatprep.subr.bf16.mxu0 0
  %298 = vmatpush1.bf16.msra.mxu0 0
  %299 = vmatprep.subr.bf16.mxu0 0
  %300 = vmatpush1.bf16.msra.mxu0 0
  %301 = vmatprep.subr.bf16.mxu0 0
  %302 = vmatpush1.bf16.msra.mxu0 0
  %303 = vmatprep.subr.bf16.mxu0 0
  %304 = vmatpush1.bf16.msra.mxu0 %v283
  %305 = vmatprep.subr.bf16.mxu0 0
  %306 = vmatpush1.bf16.msra.mxu0 %v282
  %307 = vmatprep.subr.bf16.mxu0 0
  %308 = vmatpush1.bf16.msra.mxu0 %v281
  %309 = vmatprep.subr.bf16.mxu0 0
  %310 = vmatpush2.bf16.msra.mxu0 0
  %311 = vmatprep.subr.bf16.mxu0 0
  %312 = vmatpush2.bf16.msra.mxu0 0
  %313 = vmatprep.subr.bf16.mxu0 0
  %314 = vmatpush2.bf16.msra.mxu0 0
  %315 = vmatprep.subr.bf16.mxu0 0
  %316 = vmatpush2.bf16.msra.mxu0 0
  %317 = vmatprep.subr.bf16.mxu0 0
  %318 = vmatpush2.bf16.msra.mxu0 0
  %319 = vmatprep.subr.bf16.mxu0 0
  %320 = vmatpush2.bf16.msra.mxu0 0
  %321 = vmatprep.subr.bf16.mxu0 0
  %322 = vmatpush2.bf16.msra.mxu0 0
  %323 = vmatprep.subr.bf16.mxu0 0
  %324 = vmatpush2.bf16.msra.mxu0 0
  %325 = vmatprep.mubr.bf16.mxu0 0
  %326 = vmatmul.mubr.bf16.gmra.mxu0 %v285
  %v327 = vpop.f32.mrf.mxu0
  %v328 = vadd.f32 0.0, %v327
  %v329 = vpop.f32.mrf.mxu0
  %v330 = vpop.f32.mrf.mxu0
  %v331 = vadd.f32 0.0, %v330
  %v332 = vpop.f32.mrf.mxu0
  %333 = vmatprep.mubr.bf16.mxu0 0
  %334 = vmatmul.mubr.bf16.gmra.mxu0 %v288
  %v335 = vpop.f32.mrf.mxu0
  %v336 = vadd.f32 0.0, %v335
  %v337 = vpop.f32.mrf.mxu0
  %v338 = vpop.f32.mrf.mxu0
  %v339 = vadd.f32 0.0, %v338
  %v340 = vpop.f32.mrf.mxu0
  %341 = vmatprep.mubr.bf16.mxu0 0
  %342 = vmatmul.mubr.bf16.gmra.mxu0 %v291
  %v343 = vpop.f32.mrf.mxu0
  %v344 = vadd.f32 0.0, %v343
  %v345 = vpop.f32.mrf.mxu0
  %v346 = vpop.f32.mrf.mxu0
  %v347 = vadd.f32 0.0, %v346
  %v348 = vpop.f32.mrf.mxu0
  %349 = vdwg.mxu0
  %v350 = vlaneseq
  %v351 = vshrl.u32 %v350, 7
  %v352 = vsub.s32 0, %v351
  %v353 = vrot.slane %v250, %v352
  %v354 = vmul.f32 %v353, %v328
  %v355 = vmul.f32 %v353, %v331
  %v356 = vmul.f32 %v353, %v336
  %v357 = vmul.f32 %v353, %v339
  %v358 = vmul.f32 %v353, %v344
  %v359 = vmul.f32 %v353, %v347
  %v360 = vadd.f32 %v275, %v354
  %v361 = vadd.f32 %v276, %v355
  %v362 = vadd.f32 %v277, %v356
  %v363 = vadd.f32 %v278, %v357
  %v364 = vadd.f32 %v279, %v358
  %v365 = vadd.f32 %v280, %v359
  %v366 = vpack.c.bf16 %v331, %v328
  %v367 = vpack.c.bf16 %v339, %v336
  %v368 = vpack.c.bf16 %v347, %v344
  %369 = vmatprep.subr.bf16.mxu0 0
  %370 = vmatpush1.bf16.msra.mxu0 0
  %371 = vmatprep.subr.bf16.mxu0 0
  %372 = vmatpush1.bf16.msra.mxu0 0
  %373 = vmatprep.subr.bf16.mxu0 0
  %374 = vmatpush1.bf16.msra.mxu0 0
  %375 = vmatprep.subr.bf16.mxu0 0
  %376 = vmatpush1.bf16.msra.mxu0 0
  %377 = vmatprep.subr.bf16.mxu0 0
  %378 = vmatpush1.bf16.msra.mxu0 0
  %379 = vmatprep.subr.bf16.mxu0 0
  %380 = vmatpush1.bf16.msra.mxu0 %v368
  %381 = vmatprep.subr.bf16.mxu0 0
  %382 = vmatpush1.bf16.msra.mxu0 %v367
  %383 = vmatprep.subr.bf16.mxu0 0
  %384 = vmatpush1.bf16.msra.mxu0 %v366
  %385 = vmatprep.subr.bf16.mxu0 0
  %386 = vmatpush2.bf16.msra.mxu0 0
  %387 = vmatprep.subr.bf16.mxu0 0
  %388 = vmatpush2.bf16.msra.mxu0 0
  %389 = vmatprep.subr.bf16.mxu0 0
  %390 = vmatpush2.bf16.msra.mxu0 0
  %391 = vmatprep.subr.bf16.mxu0 0
  %392 = vmatpush2.bf16.msra.mxu0 0
  %393 = vmatprep.subr.bf16.mxu0 0
  %394 = vmatpush2.bf16.msra.mxu0 0
  %395 = vmatprep.subr.bf16.mxu0 0
  %396 = vmatpush2.bf16.msra.mxu0 0
  %397 = vmatprep.subr.bf16.mxu0 0
  %398 = vmatpush2.bf16.msra.mxu0 0
  %399 = vmatprep.subr.bf16.mxu0 0
  %400 = vmatpush2.bf16.msra.mxu0 0
  %401 = vmatprep.mubr.bf16.mxu0 0
  %402 = vmatmul.mubr.bf16.gmra.mxu0 %v285
  %v403 = vpop.f32.mrf.mxu0
  %v404 = vadd.f32 0.0, %v403
  %v405 = vpop.f32.mrf.mxu0
  %v406 = vpop.f32.mrf.mxu0
  %v407 = vadd.f32 0.0, %v406
  %v408 = vpop.f32.mrf.mxu0
  %409 = vmatprep.mubr.bf16.mxu0 0
  %410 = vmatmul.mubr.bf16.gmra.mxu0 %v288
  %v411 = vpop.f32.mrf.mxu0
  %v412 = vadd.f32 0.0, %v411
  %v413 = vpop.f32.mrf.mxu0
  %v414 = vpop.f32.mrf.mxu0
  %v415 = vadd.f32 0.0, %v414
  %v416 = vpop.f32.mrf.mxu0
  %417 = vmatprep.mubr.bf16.mxu0 0
  %418 = vmatmul.mubr.bf16.gmra.mxu0 %v291
  %v419 = vpop.f32.mrf.mxu0
  %v420 = vadd.f32 0.0, %v419
  %v421 = vpop.f32.mrf.mxu0
  %v422 = vpop.f32.mrf.mxu0
  %v423 = vadd.f32 0.0, %v422
  %v424 = vpop.f32.mrf.mxu0
  %425 = vdwg.mxu0
  %v426 = vlaneseq
  %v427 = vshrl.u32 %v426, 7
  %v428 = vsub.s32 0, %v427
  %v429 = vrot.slane %v251, %v428
  %v430 = vmul.f32 %v429, %v404
  %v431 = vmul.f32 %v429, %v407
  %v432 = vmul.f32 %v429, %v412
  %v433 = vmul.f32 %v429, %v415
  %v434 = vmul.f32 %v429, %v420
  %v435 = vmul.f32 %v429, %v423
  %v436 = vadd.f32 %v360, %v430
  %v437 = vadd.f32 %v361, %v431
  %v438 = vadd.f32 %v362, %v432
  %v439 = vadd.f32 %v363, %v433
  %v440 = vadd.f32 %v364, %v434
  %v441 = vadd.f32 %v365, %v435
  %v442 = vpack.c.bf16 %v407, %v404
  %v443 = vpack.c.bf16 %v415, %v412
  %v444 = vpack.c.bf16 %v423, %v420
  %445 = vmatprep.subr.bf16.mxu0 0
  %446 = vmatpush1.bf16.msra.mxu0 0
  %447 = vmatprep.subr.bf16.mxu0 0
  %448 = vmatpush1.bf16.msra.mxu0 0
  %449 = vmatprep.subr.bf16.mxu0 0
  %450 = vmatpush1.bf16.msra.mxu0 0
  %451 = vmatprep.subr.bf16.mxu0 0
  %452 = vmatpush1.bf16.msra.mxu0 0
  %453 = vmatprep.subr.bf16.mxu0 0
  %454 = vmatpush1.bf16.msra.mxu0 0
  %455 = vmatprep.subr.bf16.mxu0 0
  %456 = vmatpush1.bf16.msra.mxu0 %v444
  %457 = vmatprep.subr.bf16.mxu0 0
  %458 = vmatpush1.bf16.msra.mxu0 %v443
  %459 = vmatprep.subr.bf16.mxu0 0
  %460 = vmatpush1.bf16.msra.mxu0 %v442
  %461 = vmatprep.subr.bf16.mxu0 0
  %462 = vmatpush2.bf16.msra.mxu0 0
  %463 = vmatprep.subr.bf16.mxu0 0
  %464 = vmatpush2.bf16.msra.mxu0 0
  %465 = vmatprep.subr.bf16.mxu0 0
  %466 = vmatpush2.bf16.msra.mxu0 0
  %467 = vmatprep.subr.bf16.mxu0 0
  %468 = vmatpush2.bf16.msra.mxu0 0
  %469 = vmatprep.subr.bf16.mxu0 0
  %470 = vmatpush2.bf16.msra.mxu0 0
  %471 = vmatprep.subr.bf16.mxu0 0
  %472 = vmatpush2.bf16.msra.mxu0 0
  %473 = vmatprep.subr.bf16.mxu0 0
  %474 = vmatpush2.bf16.msra.mxu0 0
  %475 = vmatprep.subr.bf16.mxu0 0
  %476 = vmatpush2.bf16.msra.mxu0 0
  %477 = vmatprep.mubr.bf16.mxu0 0
  %478 = vmatmul.mubr.bf16.gmra.mxu0 %v285
  %v479 = vpop.f32.mrf.mxu0
  %v480 = vadd.f32 0.0, %v479
  %v481 = vpop.f32.mrf.mxu0
  %v482 = vpop.f32.mrf.mxu0
  %v483 = vadd.f32 0.0, %v482
  %v484 = vpop.f32.mrf.mxu0
  %485 = vmatprep.mubr.bf16.mxu0 0
  %486 = vmatmul.mubr.bf16.gmra.mxu0 %v288
  %v487 = vpop.f32.mrf.mxu0
  %v488 = vadd.f32 0.0, %v487
  %v489 = vpop.f32.mrf.mxu0
  %v490 = vpop.f32.mrf.mxu0
  %v491 = vadd.f32 0.0, %v490
  %v492 = vpop.f32.mrf.mxu0
  %493 = vmatprep.mubr.bf16.mxu0 0
  %494 = vmatmul.mubr.bf16.gmra.mxu0 %v291
  %v495 = vpop.f32.mrf.mxu0
  %v496 = vadd.f32 0.0, %v495
  %v497 = vpop.f32.mrf.mxu0
  %v498 = vpop.f32.mrf.mxu0
  %v499 = vadd.f32 0.0, %v498
  %v500 = vpop.f32.mrf.mxu0
  %501 = vdwg.mxu0
  %v502 = vlaneseq
  %v503 = vshrl.u32 %v502, 7
  %v504 = vsub.s32 0, %v503
  %v505 = vrot.slane %v252, %v504
  %v506 = vmul.f32 %v505, %v480
  %v507 = vmul.f32 %v505, %v483
  %v508 = vmul.f32 %v505, %v488
  %v509 = vmul.f32 %v505, %v491
  %v510 = vmul.f32 %v505, %v496
  %v511 = vmul.f32 %v505, %v499
  %v512 = vadd.f32 %v436, %v506
  %v513 = vadd.f32 %v437, %v507
  %v514 = vadd.f32 %v438, %v508
  %v515 = vadd.f32 %v439, %v509
  %v516 = vadd.f32 %v440, %v510
  %v517 = vadd.f32 %v441, %v511
  %vm518 = vcmask 261120
  %519 = vst.msk [vmem:[#allocation2] sm:$0xff] %vm518, %v512
  %520 = vst.msk [vmem:[#allocation2 + $0x8] sm:$0xff] %vm518, %v513
  %521 = vst.msk [vmem:[#allocation2 + $0x10] sm:$0xff] %vm518, %v514
  %522 = vst.msk [vmem:[#allocation2 + $0x18] sm:$0xff] %vm518, %v515
  %523 = vst.msk [vmem:[#allocation2 + $0x20] sm:$0xff] %vm518, %v516
  %524 = vst.msk [vmem:[#allocation2 + $0x28] sm:$0xff] %vm518, %v517
  %s525 = sld [smem:[#allocation4]]
  %s526 = scalar_lea.vmem [#allocation2], %s525
  %v527 = vld [vmem:[%s526] sm:$0x1]
  %s528 = sld [smem:[#allocation5]]
  %s529 = scalar_lea.vmem [#allocation2], %s528
  %v530 = vld [vmem:[%s529] sm:$0x1]
  %s531 = sld [smem:[#allocation4 + $0x1]]
  %s532 = scalar_lea.vmem [#allocation2], %s531
  %v533 = vld [vmem:[%s532] sm:$0x1]
  %s534 = sld [smem:[#allocation5 + $0x1]]
  %s535 = scalar_lea.vmem [#allocation2], %s534
  %v536 = vld [vmem:[%s535] sm:$0x1]
  %s537 = sld [smem:[#allocation4 + $0x2]]
  %s538 = scalar_lea.vmem [#allocation2], %s537
  %v539 = vld [vmem:[%s538] sm:$0x1]
  %s540 = sld [smem:[#allocation5 + $0x2]]
  %s541 = scalar_lea.vmem [#allocation2], %s540
  %v542 = vld [vmem:[%s541] sm:$0x1]
  %s543 = sld [smem:[#allocation4 + $0x3]]
  %s544 = scalar_lea.vmem [#allocation2], %s543
  %v545 = vld [vmem:[%s544] sm:$0x1]
  %s546 = sld [smem:[#allocation5 + $0x3]]
  %s547 = scalar_lea.vmem [#allocation2], %s546
  %v548 = vld [vmem:[%s547] sm:$0x1]
  %s549 = sld [smem:[#allocation4 + $0x4]]
  %s550 = scalar_lea.vmem [#allocation2], %s549
  %v551 = vld [vmem:[%s550] sm:$0x1]
  %s552 = sld [smem:[#allocation5 + $0x4]]
  %s553 = scalar_lea.vmem [#allocation2], %s552
  %v554 = vld [vmem:[%s553] sm:$0x1]
  %s555 = sld [smem:[#allocation4 + $0x5]]
  %s556 = scalar_lea.vmem [#allocation2], %s555
  %v557 = vld [vmem:[%s556] sm:$0x1]
  %s558 = sld [smem:[#allocation5 + $0x5]]
  %s559 = scalar_lea.vmem [#allocation2], %s558
  %v560 = vld [vmem:[%s559] sm:$0x1]
  %s561 = sld [smem:[#allocation4 + $0x6]]
  %s562 = scalar_lea.vmem [#allocation2], %s561
  %v563 = vld [vmem:[%s562] sm:$0x1]
  %s564 = sld [smem:[#allocation5 + $0x6]]
  %s565 = scalar_lea.vmem [#allocation2], %s564
  %v566 = vld [vmem:[%s565] sm:$0x1]
  %s567 = sld [smem:[#allocation4 + $0x7]]
  %s568 = scalar_lea.vmem [#allocation2], %s567
  %v569 = vld [vmem:[%s568] sm:$0x1]
  %s570 = sld [smem:[#allocation5 + $0x7]]
  %s571 = scalar_lea.vmem [#allocation2], %s570
  %v572 = vld [vmem:[%s571] sm:$0x1]
  %v574 = vrot.slane %v533, 7
  %v577 = vrot.slane %v539, 6
  %v580 = vrot.slane %v545, 5
  %v583 = vrot.slane %v551, 4
  %v586 = vrot.slane %v557, 3
  %v589 = vrot.slane %v563, 2
  %v592 = vrot.slane %v569, 1
  %vm594 = vcmask 1040384
  %v595 = vsel %vm594, %v527, %v574
  %vm596 = vcmask 1041408
  %v597 = vsel %vm596, %v595, %v577
  %vm598 = vcmask 1042432
  %v599 = vsel %vm598, %v597, %v580
  %vm600 = vcmask 1043456
  %v601 = vsel %vm600, %v599, %v583
  %vm602 = vcmask 1044480
  %v603 = vsel %vm602, %v601, %v586
  %vm604 = vcmask 1045504
  %v605 = vsel %vm604, %v603, %v589
  %vm606 = vcmask 1046528
  %v607 = vsel %vm606, %v605, %v592
  %v609 = vrot.slane %v536, 7
  %v612 = vrot.slane %v542, 6
  %v615 = vrot.slane %v548, 5
  %v618 = vrot.slane %v554, 4
  %v621 = vrot.slane %v560, 3
  %v624 = vrot.slane %v566, 2
  %v627 = vrot.slane %v572, 1
  %v629 = vsel %vm594, %v530, %v609
  %v630 = vsel %vm596, %v629, %v612
  %v631 = vsel %vm598, %v630, %v615
  %v632 = vsel %vm600, %v631, %v618
  %v633 = vsel %vm602, %v632, %v621
  %v634 = vsel %vm604, %v633, %v624
  %v635 = vsel %vm606, %v634, %v627
  %v636 = vmul.f32 %v607, %v635
  %v637 = vsel %vm518, %v636, 0.0
  %638 = vadd.xlane.f32.xlu0 %v637
  %v639 = vpop.xlane.xlu0 %638
  %vm640 = vcmask 7168
  %641 = vst.msk [vmem:[%s7] sm:$0xff] %vm640, %v639
  // Predicated region
  $region22: #{tpu_custom_call.1} parent=0 // pred_check
    _
  $region23: #{tpu_custom_call.1} parent=0 // pred_check_branch
    %643 = sbr.rel (0) target = $region25
  $region24: #{tpu_custom_call.1} parent=0 // pred_region
    _
  $region25: #{tpu_custom_call.1} parent=0 // pred_fallthru
    _
  // Predicated region
  $region26: #{tpu_custom_call.1} parent=0 // pred_check
    _
  $region27: #{tpu_custom_call.1} parent=0 // pred_check_branch
    %645 = sbr.rel (0) target = $region29
  $region28: #{tpu_custom_call.1} parent=0 // pred_region
    _
  $region29: #{tpu_custom_call.1} parent=0 // pred_fallthru
    _

</llo_original>
